<compile_context>
chip_gen: v5e
topology: v5e:2x2
jax: 0.10.0
libtpu: 0.0.40
codegen_flags: <defaults>
</compile_context>

<pallas_src>
import jax
import jax.numpy as jnp
from jax.experimental import pallas as pl
from jax.experimental.pallas import tpu as pltpu


def _round_up(n, m):
    return ((n + m - 1) // m) * m


def _cdiv(a, b):
    return (a + b - 1) // b


def _fusion_kernel(text_ref, xlm_ref, wt_ref, wx_ref, b_ref, out_ref):
    # text_ref, xlm_ref : [TM, H]   (VMEM, input dtype)
    # wt_ref, wx_ref    : [1, H]    (VMEM, f32, resident across grid steps)
    # b_ref             : [1, 1]    (SMEM, f32 gate bias)
    # out_ref           : [TM, 2H]  (VMEM, output dtype)
    t = text_ref[...]
    x = xlm_ref[...]
    wt = wt_ref[...]          # [1, H] f32 (broadcasts over rows)
    wx = wx_ref[...]          # [1, H] f32

    # gate logit = [t ; x] @ W^T + b  ==  sum(t*w_t) + sum(x*w_x) + b.
    # Two separate lane reduces keep only one [TM, H] f32 temp live at a time;
    # the multiplies promote to f32 in-register (weights are f32).
    logit = (jnp.sum(t * wt, axis=-1, keepdims=True)
             + jnp.sum(x * wx, axis=-1, keepdims=True)
             + b_ref[0, 0])
    gate = jax.nn.sigmoid(logit)                      # [TM, 1] f32

    h = t.shape[-1]
    # Keep the gate in f32 for the multiplies; cast only at the store.
    out_ref[:, :h] = (t * gate).astype(out_ref.dtype)
    out_ref[:, h:] = (x * (1.0 - gate)).astype(out_ref.dtype)
    # TODO(synk): dropout(p=0.1) is identity in eval mode; training-mode
    # dropout would use pltpu.prng_seed / pltpu.prng_random_bits here.


def _select_tile_and_vmem_limit(M, H, dtype):
    """Pick a row tile TM and a scoped-VMEM limit from the HW generation."""
    dtype_bytes = jnp.dtype(dtype).itemsize
    # Double-buffered per-row VMEM footprint: 2 bufs x (t[H] + x[H] + out[2H]).
    bytes_per_row = 8 * H * dtype_bytes

    try:  # physical VMEM: 128 MiB on v5e/v6e, 64 MiB per core on v7x.
        phys = int(pltpu.get_tpu_info().vmem_capacity_bytes)
    except Exception:
        phys = 64 << 20  # conservative fallback (v7x per-core size)
    # Scoped limit: ~48 MiB on v7x, 64 MiB on v5e/v6e -- above the 16/32 MiB
    # defaults, comfortably below physical.
    vmem_limit = min(phys * 3 // 4, 64 << 20)

    # Use <= ~60% of the scoped limit for the streamed tiles; prefer the
    # largest tile that fits (per-grid-step overhead ~0.35 us), capped at
    # 2048 rows where the HBM roofline has flattened out.
    budget = (vmem_limit * 6) // 10
    tm = max(8, min(budget // bytes_per_row, 2048))
    tm = (tm // 8) * 8

    # Keep at least 2 row tiles so v7x's two TensorCores both get work.
    tm = max(8, min(tm, _round_up(_cdiv(M, 2), 8)))

    # Prefer an even number of tiles (balanced 2-core split) when cheap.
    grid = _cdiv(M, tm)
    if grid > 1 and grid % 2 == 1:
        tm_even = max(8, _round_up(_cdiv(M, grid + 1), 8))
        if _cdiv(M, tm_even) % 2 == 0:
            tm = tm_even
    return tm, int(vmem_limit)


def gated_feature_fusion(text_output, xlm_output, gate_weight, gate_bias):
    """text_output, xlm_output: [B, S, H]; gate_weight: [1, 2H]; gate_bias: [1]."""
    B, S, H = text_output.shape
    M = B * S
    dtype = text_output.dtype

    t2 = text_output.reshape(M, H)   # free row-major reshapes
    x2 = xlm_output.reshape(M, H)

    # Split the Linear(2H -> 1) weight into the halves multiplying text / xlm,
    # kept as f32 [1, H] rows resident in VMEM across all grid steps.
    w_t = gate_weight[:, :H].astype(jnp.float32)
    w_x = gate_weight[:, H:].astype(jnp.float32)
    b = gate_bias.reshape(1, 1).astype(jnp.float32)

    TM, vmem_limit = _select_tile_and_vmem_limit(M, H, dtype)
    grid = (_cdiv(M, TM),)  # ragged last block masked by Pallas: no pad, no slice

    fused = pl.pallas_call(
        _fusion_kernel,
        out_shape=jax.ShapeDtypeStruct((M, 2 * H), dtype),
        grid_spec=pl.GridSpec(
            grid=grid,
            in_specs=[
                pl.BlockSpec((TM, H), lambda i: (i, 0)),
                pl.BlockSpec((TM, H), lambda i: (i, 0)),
                pl.BlockSpec((1, H), lambda i: (0, 0)),   # resident weights
                pl.BlockSpec((1, H), lambda i: (0, 0)),
                pl.BlockSpec(memory_space=pltpu.MemorySpace.SMEM),
            ],
            out_specs=pl.BlockSpec((TM, 2 * H), lambda i: (i, 0)),
        ),
        compiler_params=pltpu.CompilerParams(
            dimension_semantics=("parallel",),   # v7x: 2 TCs split the row tiles
            vmem_limit_bytes=vmem_limit),
    )(t2, x2, w_t, w_x, b)

    return fused.reshape(B, S, 2 * H)


def _reference(text_output, xlm_output, gate_weight, gate_bias):
    combined = jnp.concatenate([text_output, xlm_output], axis=-1)
    logit = combined @ gate_weight[0].astype(jnp.float32) + gate_bias[0]
    gate = jax.nn.sigmoid(logit)[..., None]
    return jnp.concatenate(
        [text_output * gate, xlm_output * (1.0 - gate)], axis=-1)


if __name__ == "__main__":
    B, S, H = 2, 8, 32  # batch, seq, hidden_dim (module uses hidden_dim = 32)
    key = jax.random.PRNGKey(0)
    k1, k2, k3, k4 = jax.random.split(key, 4)

    # Deterministic "encoder outputs" standing in for text_encoder / xlm_encoder.
    text_output = jax.random.normal(k1, (B, S, H), dtype=jnp.float32)
    xlm_output = jax.random.normal(k2, (B, S, H), dtype=jnp.float32)

    # nn.Linear(2H, 1) parameters, deterministically initialized.
    gate_weight = 0.1 * jax.random.normal(k3, (1, 2 * H), dtype=jnp.float32)
    gate_bias = 0.1 * jax.random.normal(k4, (1,), dtype=jnp.float32)

    fused = gated_feature_fusion(text_output, xlm_output, gate_weight, gate_bias)
    fused = jax.block_until_ready(fused)

    ref = _reference(text_output, xlm_output, gate_weight, gate_bias)
    assert fused.shape == (B, S, 2 * H)
    assert jnp.allclose(fused, ref, atol=1e-5, rtol=1e-5)

    print("KERNEL_OK")
</pallas_src>

<mosaic_0001>
module attributes {stable_mosaic.version = 11 : i64} {
  func.func @_fusion_kernel(%arg0: i32, %arg1: memref<8x32xf32, #tpu.memory_space<vmem>>, %arg2: memref<8x32xf32, #tpu.memory_space<vmem>>, %arg3: memref<1x32xf32, #tpu.memory_space<vmem>>, %arg4: memref<1x32xf32, #tpu.memory_space<vmem>>, %arg5: memref<1x1xf32, #tpu.memory_space<smem>>, %arg6: memref<8x64xf32, #tpu.memory_space<vmem>>) attributes {dimension_semantics = [#tpu.dimension_semantics<parallel>], iteration_bounds = array<i64: 2>, scalar_prefetch = 0 : i64, scratch_operands = 0 : i64, tpu.core_type = #tpu.core_type<tc>, window_params = [{transform_indices = @transform_0, window_bounds = array<i64: 8, 32>}, {transform_indices = @transform_1, window_bounds = array<i64: 8, 32>}, {pipeline_mode = #tpu.pipeline_mode<synchronous>, transform_indices = @transform_2, window_bounds = array<i64: 1, 32>}, {pipeline_mode = #tpu.pipeline_mode<synchronous>, transform_indices = @transform_3, window_bounds = array<i64: 1, 32>}, {transform_indices = @transform_4, window_bounds = array<i64: 1, 1>}, {transform_indices = @transform_5, window_bounds = array<i64: 8, 64>}]} {
    %c0 = arith.constant 0 : index
    %c0_0 = arith.constant 0 : index
    %0 = vector.load %arg1[%c0, %c0_0] : memref<8x32xf32, #tpu.memory_space<vmem>>, vector<8x32xf32>
    %c0_1 = arith.constant 0 : index
    %c0_2 = arith.constant 0 : index
    %1 = vector.load %arg2[%c0_1, %c0_2] : memref<8x32xf32, #tpu.memory_space<vmem>>, vector<8x32xf32>
    %c0_3 = arith.constant 0 : index
    %c0_4 = arith.constant 0 : index
    %2 = vector.load %arg3[%c0_3, %c0_4] : memref<1x32xf32, #tpu.memory_space<vmem>>, vector<1x32xf32>
    %c0_5 = arith.constant 0 : index
    %c0_6 = arith.constant 0 : index
    %3 = vector.load %arg4[%c0_5, %c0_6] : memref<1x32xf32, #tpu.memory_space<vmem>>, vector<1x32xf32>
    %4 = vector.broadcast %2 : vector<1x32xf32> to vector<8x32xf32>
    %5 = arith.mulf %0, %4 : vector<8x32xf32>
    %cst = arith.constant dense<0.000000e+00> : vector<8xf32>
    %6 = vector.multi_reduction <add>, %5, %cst [1] : vector<8x32xf32> to vector<8xf32>
    %7 = vector.shape_cast %6 : vector<8xf32> to vector<8x1xf32>
    %8 = vector.broadcast %3 : vector<1x32xf32> to vector<8x32xf32>
    %9 = arith.mulf %1, %8 : vector<8x32xf32>
    %cst_7 = arith.constant dense<0.000000e+00> : vector<8xf32>
    %10 = vector.multi_reduction <add>, %9, %cst_7 [1] : vector<8x32xf32> to vector<8xf32>
    %11 = vector.shape_cast %10 : vector<8xf32> to vector<8x1xf32>
    %12 = arith.addf %7, %11 : vector<8x1xf32>
    %c0_8 = arith.constant 0 : index
    %c0_9 = arith.constant 0 : index
    %13 = memref.load %arg5[%c0_8, %c0_9] : memref<1x1xf32, #tpu.memory_space<smem>>
    %14 = vector.broadcast %13 : f32 to vector<8x1xf32>
    %15 = arith.addf %12, %14 : vector<8x1xf32>
    %16 = arith.negf %15 : vector<8x1xf32>
    %17 = math.exp %16 : vector<8x1xf32>
    %cst_10 = arith.constant 1.000000e+00 : f32
    %18 = vector.broadcast %cst_10 : f32 to vector<8x1xf32>
    %19 = arith.addf %18, %17 : vector<8x1xf32>
    %20 = arith.divf %18, %19 : vector<8x1xf32>
    %21 = vector.broadcast %20 : vector<8x1xf32> to vector<8x32xf32>
    %22 = arith.mulf %0, %21 : vector<8x32xf32>
    %c0_11 = arith.constant 0 : index
    %c0_12 = arith.constant 0 : index
    %23 = vector.load %arg6[%c0_11, %c0_12] : memref<8x64xf32, #tpu.memory_space<vmem>>, vector<8x32xf32>
    tpu.vector_store %arg6[%c0_11, %c0_12], %22 {strides = array<i32>} : memref<8x64xf32, #tpu.memory_space<vmem>>, vector<8x32xf32>,
    %cst_13 = arith.constant 1.000000e+00 : f32
    %24 = vector.broadcast %cst_13 : f32 to vector<8x1xf32>
    %25 = arith.subf %24, %20 : vector<8x1xf32>
    %26 = vector.broadcast %25 : vector<8x1xf32> to vector<8x32xf32>
    %27 = arith.mulf %1, %26 : vector<8x32xf32>
    %c0_14 = arith.constant 0 : index
    %c32 = arith.constant 32 : index
    %28 = vector.load %arg6[%c0_14, %c32] : memref<8x64xf32, #tpu.memory_space<vmem>>, vector<8x32xf32>
    tpu.vector_store %arg6[%c0_14, %c32], %27 {strides = array<i32>} : memref<8x64xf32, #tpu.memory_space<vmem>>, vector<8x32xf32>,
    return
  }
  func.func @transform_0(%arg0: i32) -> (i32, i32) {
    %c0_i32 = arith.constant 0 : i32
    %c0_i32_0 = arith.constant 0 : i32
    return %arg0, %c0_i32 : i32, i32
  }
  func.func @transform_1(%arg0: i32) -> (i32, i32) {
    %c0_i32 = arith.constant 0 : i32
    %c0_i32_0 = arith.constant 0 : i32
    return %arg0, %c0_i32 : i32, i32
  }
  func.func @transform_2(%arg0: i32) -> (i32, i32) {
    %c0_i32 = arith.constant 0 : i32
    %c0_i32_0 = arith.constant 0 : i32
    %c0_i32_1 = arith.constant 0 : i32
    return %c0_i32, %c0_i32_0 : i32, i32
  }
  func.func @transform_3(%arg0: i32) -> (i32, i32) {
    %c0_i32 = arith.constant 0 : i32
    %c0_i32_0 = arith.constant 0 : i32
    %c0_i32_1 = arith.constant 0 : i32
    return %c0_i32, %c0_i32_0 : i32, i32
  }
  func.func @transform_4(%arg0: i32) -> (i32, i32) {
    %c0_i32 = arith.constant 0 : i32
    %c0_i32_0 = arith.constant 0 : i32
    %c0_i32_1 = arith.constant 0 : i32
    return %c0_i32, %c0_i32_0 : i32, i32
  }
  func.func @transform_5(%arg0: i32) -> (i32, i32) {
    %c0_i32 = arith.constant 0 : i32
    %c0_i32_0 = arith.constant 0 : i32
    return %arg0, %c0_i32 : i32, i32
  }
}

</mosaic_0001>

<llo_original>
// kernel: tpu_custom_call.1
$region0: #{tpu_custom_call.1}
  #allocation0 [shape = 'u32[]', space=smem, size = 0x4, offset = 0x4, fixed_abs, tag = 'smem constant byte address 0x4 - core index']
  #allocation1 [shape = 'u32[72,128]{1,0:T(1,128)}', space=vmem, size = 0x9000, scoped, tag = 'internal scratch']
  #allocation2 [shape = 'f32[1,1]{1,0:T(1,128)S(6)}', space=smem, size = 0x200, scoped, tag = 'scoped memory for tpu_custom_call.1']
  %s0 = inlined_call_operand.hbm [shape: f32[16,32], index: 0, kind: input, shape index: {}]
  %s1 = inlined_call_operand.hbm [shape: f32[16,32], index: 1, kind: input, shape index: {}]
  %s2 = inlined_call_operand.vmem [shape: f32[1,32], index: 2, kind: input, shape index: {}]
  %s3 = inlined_call_operand.vmem [shape: f32[1,32], index: 3, kind: input, shape index: {}]
  %s4 = inlined_call_operand.<no memory space> [shape: f32[1,1], index: 4, kind: input, shape index: {}]
  %s5 = inlined_call_operand.hbm [shape: f32[16,64], index: 5, kind: output, shape index: {}]
  %s6 = sld [smem:[#allocation0]]
  $region61: #{tpu_custom_call.1} parent=0
    _
  %s8 = ssub.s32 1, %s6
  %s9 = scalar_select 0, %s8, %s6
  %10 = sst [smem:[#allocation2]] %s4
  $region1: #{tpu_custom_call.1} parent=0
    #allocation3 [shape = 'u8[8192]{0}', space=vmem, size = 0x2000, scoped, tag = 'input window, operand 0']
    #allocation4 [shape = 's32[2]{0}', space=sflag, size = 0x8, scoped, tag = 'scoped memory for tpu_custom_call.1']
    #allocation5 [shape = 's32[2]{0}', space=sflag, size = 0x8, scoped, tag = 'scoped memory for tpu_custom_call.1']
    #allocation6 [shape = 'u8[8192]{0}', space=vmem, size = 0x2000, scoped, tag = 'input window, operand 1']
    #allocation7 [shape = 's32[2]{0}', space=sflag, size = 0x8, scoped, tag = 'scoped memory for tpu_custom_call.1']
    #allocation8 [shape = 'u8[8192]{0}', space=vmem, size = 0x2000, scoped, tag = 'output window, operand 0']
    %11 = vsyncpa [#allocation4], 0
    %s12 = scalar_lea.sflag [#allocation4], 1
    %13 = vsyncpa %s12, 0
    %14 = vsyncpa [#allocation7], 0
    %s15 = scalar_lea.sflag [#allocation7], 1
    %16 = vsyncpa %s15, 0
    %17 = vsyncpa [#allocation5], 0
    %s18 = scalar_lea.sflag [#allocation5], 1
    %19 = vsyncpa %s18, 0
    loop: start=0, step=1, limit=4
    $region2: #{tpu_custom_call.1} parent=1 // loop_pre_header
      _
    $region3: #{tpu_custom_call.1} parent=1 // loop_header
      %s21 = sphi 0, %s25
      %p22 = scmp.ge.s32.totalorder %s21, 4
      %s31 = sphi 0, %s33
      %s34 = sphi 0, %s31
      %s35 = sphi 0, %s34
      %s51 = sphi 0, %s35
      %s57 = sphi 0, %s59
      %s60 = sphi 0, %s57
      %s61 = sphi 0, %s60
      %s77 = sphi 0, %s61
      %s81 = sphi 0, %s81
      %s83 = sphi 0, %s81
      %s84 = sphi 0, %s83
      %s98 = sphi 0, %s84
      %s102 = sphi 0, %s102
      %s104 = sphi 0, %s102
      %s105 = sphi 0, %s104
      %s119 = sphi 0, %s105
      %s123 = sphi 0, %s123
      %s125 = sphi 0, %s123
      %s126 = sphi 0, %s125
      %s140 = sphi 0, %s126
      %s146 = sphi 0, %s148
      %s149 = sphi 0, %s146
      %s150 = sphi 0, %s149
      %s166 = sphi 0, %s150
    $region4: #{tpu_custom_call.1} parent=1 // loop_header_branch
      %24 = sbr.rel (%p22) target = $region8
    $region5: #{tpu_custom_call.1} parent=1 // loop_body
      %s26 = ssub.s32 %s21, 1
      %s27 = ssub.s32 %s21, 2
      %s28 = sadd.s32 %s21, 1
      %s29 = ssub.s32 %s21, %s28
      %p30 = scmp.eq.s32.totalorder %s29, 0
      %s32 = sadd.s32 %s31, 1
      %s33 = scalar_select %p30, %s31, %s32
      %p36 = pneg %p30
      %p37 = scmp.eq.s32.totalorder %s21, 1
      %p38 = por %p36, %p37
      %p39 = scmp.ne.s32.totalorder %s31, %s34
      %p40 = scmp.eq.s32.totalorder %s21, 0
      %p41 = por %p39, %p40
      %p42 = scmp.ne.s32.totalorder %s31, %s34
      %p43 = scmp.eq.s32.totalorder %s26, 1
      %p44 = por %p42, %p43
      %p45 = scmp.ne.s32.totalorder %s34, %s35
      %p46 = scmp.eq.s32.totalorder %s26, 0
      %p47 = por %p45, %p46
      %p48 = scmp.ne.s32.totalorder %s34, %s35
      %p49 = scmp.eq.s32.totalorder %s27, 1
      %p50 = por %p48, %p49
      %p52 = scmp.ne.s32.totalorder %s35, %s51
      %p53 = scmp.eq.s32.totalorder %s27, 0
      %p54 = por %p52, %p53
      %s55 = ssub.s32 %s21, %s28
      %p56 = scmp.eq.s32.totalorder %s55, 0
      %s58 = sadd.s32 %s57, 1
      %s59 = scalar_select %p56, %s57, %s58
      %p62 = pneg %p56
      %p63 = scmp.eq.s32.totalorder %s21, 1
      %p64 = por %p62, %p63
      %p65 = scmp.ne.s32.totalorder %s57, %s60
      %p66 = scmp.eq.s32.totalorder %s21, 0
      %p67 = por %p65, %p66
      %p68 = scmp.ne.s32.totalorder %s57, %s60
      %p69 = scmp.eq.s32.totalorder %s26, 1
      %p70 = por %p68, %p69
      %p71 = scmp.ne.s32.totalorder %s60, %s61
      %p72 = scmp.eq.s32.totalorder %s26, 0
      %p73 = por %p71, %p72
      %p74 = scmp.ne.s32.totalorder %s60, %s61
      %p75 = scmp.eq.s32.totalorder %s27, 1
      %p76 = por %p74, %p75
      %p78 = scmp.ne.s32.totalorder %s61, %s77
      %p79 = scmp.eq.s32.totalorder %s27, 0
      %p80 = por %p78, %p79
      %s82 = sadd.s32 %s81, 1
      %p85 = scmp.eq.s32.totalorder %s21, 1
      %p86 = scmp.ne.s32.totalorder %s81, %s83
      %p87 = scmp.eq.s32.totalorder %s21, 0
      %p88 = por %p86, %p87
      %p89 = scmp.ne.s32.totalorder %s81, %s83
      %p90 = scmp.eq.s32.totalorder %s26, 1
      %p91 = por %p89, %p90
      %p92 = scmp.ne.s32.totalorder %s83, %s84
      %p93 = scmp.eq.s32.totalorder %s26, 0
      %p94 = por %p92, %p93
      %p95 = scmp.ne.s32.totalorder %s83, %s84
      %p96 = scmp.eq.s32.totalorder %s27, 1
      %p97 = por %p95, %p96
      %p99 = scmp.ne.s32.totalorder %s84, %s98
      %p100 = scmp.eq.s32.totalorder %s27, 0
      %p101 = por %p99, %p100
      %s103 = sadd.s32 %s102, 1
      %p106 = scmp.eq.s32.totalorder %s21, 1
      %p107 = scmp.ne.s32.totalorder %s102, %s104
      %p108 = scmp.eq.s32.totalorder %s21, 0
      %p109 = por %p107, %p108
      %p110 = scmp.ne.s32.totalorder %s102, %s104
      %p111 = scmp.eq.s32.totalorder %s26, 1
      %p112 = por %p110, %p111
      %p113 = scmp.ne.s32.totalorder %s104, %s105
      %p114 = scmp.eq.s32.totalorder %s26, 0
      %p115 = por %p113, %p114
      %p116 = scmp.ne.s32.totalorder %s104, %s105
      %p117 = scmp.eq.s32.totalorder %s27, 1
      %p118 = por %p116, %p117
      %p120 = scmp.ne.s32.totalorder %s105, %s119
      %p121 = scmp.eq.s32.totalorder %s27, 0
      %p122 = por %p120, %p121
      %s124 = sadd.s32 %s123, 1
      %p127 = scmp.eq.s32.totalorder %s21, 1
      %p128 = scmp.ne.s32.totalorder %s123, %s125
      %p129 = scmp.eq.s32.totalorder %s21, 0
      %p130 = por %p128, %p129
      %p131 = scmp.ne.s32.totalorder %s123, %s125
      %p132 = scmp.eq.s32.totalorder %s26, 1
      %p133 = por %p131, %p132
      %p134 = scmp.ne.s32.totalorder %s125, %s126
      %p135 = scmp.eq.s32.totalorder %s26, 0
      %p136 = por %p134, %p135
      %p137 = scmp.ne.s32.totalorder %s125, %s126
      %p138 = scmp.eq.s32.totalorder %s27, 1
      %p139 = por %p137, %p138
      %p141 = scmp.ne.s32.totalorder %s126, %s140
      %p142 = scmp.eq.s32.totalorder %s27, 0
      %p143 = por %p141, %p142
      %s144 = ssub.s32 %s21, %s28
      %p145 = scmp.eq.s32.totalorder %s144, 0
      %s147 = sadd.s32 %s146, 1
      %s148 = scalar_select %p145, %s146, %s147
      %p151 = pneg %p145
      %p152 = scmp.eq.s32.totalorder %s21, 1
      %p153 = por %p151, %p152
      %p154 = scmp.ne.s32.totalorder %s146, %s149
      %p155 = scmp.eq.s32.totalorder %s21, 0
      %p156 = por %p154, %p155
      %p157 = scmp.ne.s32.totalorder %s146, %s149
      %p158 = scmp.eq.s32.totalorder %s26, 1
      %p159 = por %p157, %p158
      %p160 = scmp.ne.s32.totalorder %s149, %s150
      %p161 = scmp.eq.s32.totalorder %s26, 0
      %p162 = por %p160, %p161
      %p163 = scmp.ne.s32.totalorder %s149, %s150
      %p164 = scmp.eq.s32.totalorder %s27, 1
      %p165 = por %p163, %p164
      %p167 = scmp.ne.s32.totalorder %s150, %s166
      %p168 = scmp.eq.s32.totalorder %s27, 0
      %p169 = por %p167, %p168
      %p170 = scmp.le.s32.totalorder 1, %s21
      %p171 = scmp.lt.s32.totalorder %s21, 3
      %p172 = pnand %p170, %p171
      %p173 = pneg %p172
      // Predicated region
      $region9: #{tpu_custom_call.1} parent=5 // pred_check
        _
      $region10: #{tpu_custom_call.1} parent=5 // pred_check_branch
        %175 = sbr.rel (%p172) target = $region12
      $region11: #{tpu_custom_call.1} parent=5 // pred_region
        %s176 = ssub.s32 %s21, 1
        // Predicated region
        $region13: #{tpu_custom_call.1} parent=11 // pred_check
          %p177 = pneg %p94
        $region14: #{tpu_custom_call.1} parent=11 // pred_check_branch
          %179 = sbr.rel (%p177) target = $region16
        $region15: #{tpu_custom_call.1} parent=11 // pred_region
          _
        $region16: #{tpu_custom_call.1} parent=11 // pred_fallthru
          _
        // Predicated region
        $region17: #{tpu_custom_call.1} parent=11 // pred_check
          %p180 = pneg %p115
        $region18: #{tpu_custom_call.1} parent=11 // pred_check_branch
          %182 = sbr.rel (%p180) target = $region20
        $region19: #{tpu_custom_call.1} parent=11 // pred_region
          _
        $region20: #{tpu_custom_call.1} parent=11 // pred_fallthru
          _
        // Predicated region
        $region21: #{tpu_custom_call.1} parent=11 // pred_check
          %p183 = pneg %p136
        $region22: #{tpu_custom_call.1} parent=11 // pred_check_branch
          %185 = sbr.rel (%p183) target = $region24
        $region23: #{tpu_custom_call.1} parent=11 // pred_region
          _
        $region24: #{tpu_custom_call.1} parent=11 // pred_fallthru
          _
      $region12: #{tpu_custom_call.1} parent=5 // pred_fallthru
        _
      %p186 = scmp.lt.s32.totalorder %s21, 2
      // Predicated region
      $region25: #{tpu_custom_call.1} parent=5 // pred_check
        %p187 = pneg %p186
      $region26: #{tpu_custom_call.1} parent=5 // pred_check_branch
        %189 = sbr.rel (%p187) target = $region28
      $region27: #{tpu_custom_call.1} parent=5 // pred_region
        // Predicated region
        $region29: #{tpu_custom_call.1} parent=27 // pred_check
          %p190 = pneg %p41
        $region30: #{tpu_custom_call.1} parent=27 // pred_check_branch
          %192 = sbr.rel (%p190) target = $region32
        $region31: #{tpu_custom_call.1} parent=27 // pred_region
          %s193 = sand.u32 %s31, 1
          %s194 = scalar_lea.sflag [#allocation4], %s193
          %s195 = sand.u32 %s31, 1
          %s196 = smul.addr %s195, 8
          %s197 = scalar_lea.vmem [#allocation3], %s196
          %199 = vsyncadd %s194, 0
          %s200 = smul.addr %s21, 8
          %s201 = scalar_lea.hbm %s0, %s200
          %s203 = sshll.u32 %s201, 4
          %s204 = int_to_ptr.hbm [resolvable:$true] %s203
          %s205 = sshll.u32 %s197, 4
          %s206 = int_to_ptr.vmem [resolvable:$true] %s205
          %208 = dma.hbm_to_vmem [thread:$0]  %s204, 128, %s206, %s194
        $region32: #{tpu_custom_call.1} parent=27 // pred_fallthru
          _
        // Predicated region
        $region33: #{tpu_custom_call.1} parent=27 // pred_check
          %p209 = pneg %p67
        $region34: #{tpu_custom_call.1} parent=27 // pred_check_branch
          %211 = sbr.rel (%p209) target = $region36
        $region35: #{tpu_custom_call.1} parent=27 // pred_region
          %s212 = sand.u32 %s57, 1
          %s213 = scalar_lea.sflag [#allocation7], %s212
          %s214 = sand.u32 %s57, 1
          %s215 = smul.addr %s214, 8
          %s216 = scalar_lea.vmem [#allocation6], %s215
          %218 = vsyncadd %s213, 0
          %s219 = smul.addr %s21, 8
          %s220 = scalar_lea.hbm %s1, %s219
          %s222 = sshll.u32 %s220, 4
          %s223 = int_to_ptr.hbm [resolvable:$true] %s222
          %s224 = sshll.u32 %s216, 4
          %s225 = int_to_ptr.vmem [resolvable:$true] %s224
          %227 = dma.hbm_to_vmem [thread:$0]  %s223, 128, %s225, %s213
        $region36: #{tpu_custom_call.1} parent=27 // pred_fallthru
          _
      $region28: #{tpu_custom_call.1} parent=5 // pred_fallthru
        _
      %p228 = scmp.le.s32.totalorder 1, %s21
      %p229 = scmp.lt.s32.totalorder %s21, 3
      %p230 = pnand %p228, %p229
      %p231 = pneg %p230
      // Predicated region
      $region37: #{tpu_custom_call.1} parent=5 // pred_check
        _
      $region38: #{tpu_custom_call.1} parent=5 // pred_check_branch
        %233 = sbr.rel (%p230) target = $region40
      $region39: #{tpu_custom_call.1} parent=5 // pred_region
        %s234 = ssub.s32 %s21, 1
        %s235 = sand.u32 %s34, 1
        %s236 = scalar_lea.sflag [#allocation4], %s235
        %s237 = sand.u32 %s34, 1
        %s238 = smul.addr %s237, 8
        %s239 = scalar_lea.vmem [#allocation3], %s238
        // Predicated region
        $region41: #{tpu_custom_call.1} parent=39 // pred_check
          %p240 = pneg %p47
        $region42: #{tpu_custom_call.1} parent=39 // pred_check_branch
          %242 = sbr.rel (%p240) target = $region44
        $region43: #{tpu_custom_call.1} parent=39 // pred_region
          %244 = dma.done %s236, 128
        $region44: #{tpu_custom_call.1} parent=39 // pred_fallthru
          _
        %s245 = sand.u32 %s60, 1
        %s246 = scalar_lea.sflag [#allocation7], %s245
        %s247 = sand.u32 %s60, 1
        %s248 = smul.addr %s247, 8
        %s249 = scalar_lea.vmem [#allocation6], %s248
        // Predicated region
        $region45: #{tpu_custom_call.1} parent=39 // pred_check
          %p250 = pneg %p73
        $region46: #{tpu_custom_call.1} parent=39 // pred_check_branch
          %252 = sbr.rel (%p250) target = $region48
        $region47: #{tpu_custom_call.1} parent=39 // pred_region
          %254 = dma.done %s246, 128
        $region48: #{tpu_custom_call.1} parent=39 // pred_fallthru
          _
        %s255 = sand.u32 %s34, 1
        %s256 = scalar_lea.sflag [#allocation4], %s255
        %s257 = sand.u32 %s34, 1
        %s258 = smul.addr %s257, 8
        %s259 = scalar_lea.vmem [#allocation3], %s258
        %p260 = pneg %p47
        %p261 = pneg %p44
        %s262 = sand.u32 %s60, 1
        %s263 = scalar_lea.sflag [#allocation7], %s262
        %s264 = sand.u32 %s60, 1
        %s265 = smul.addr %s264, 8
        %s266 = scalar_lea.vmem [#allocation6], %s265
        %p267 = pneg %p73
        %p268 = pneg %p70
        %p269 = pneg %p94
        %p270 = pneg %p91
        %p271 = pneg %p115
        %p272 = pneg %p112
        %p273 = pneg %p136
        %p274 = pneg %p133
        %p275 = pneg %p162
        %p276 = pneg %p159
        %s277 = sand.u32 %s149, 1
        %s278 = scalar_lea.sflag [#allocation5], %s277
        %s279 = sand.u32 %s149, 1
        %s280 = smul.addr %s279, 8
        %s281 = scalar_lea.vmem [#allocation8], %s280
        %v282 = vld [vmem:[%s239] sm:$0xff]
        %v283 = vld [vmem:[%s249] sm:$0xff]
        %v284 = vld [vmem:[%s2] sm:$0x1]
        %v285 = vld [vmem:[%s3] sm:$0x1]
        %v287 = vperm.slane %v284, 0
        %v289 = vmul.f32 %v282, %v287
        %vm290 = vcmask 261120
        %v291 = vsel %vm290, %v289, 0.0
        %292 = vadd.xlane.f32.xlu0 %v291
        %v293 = vpop.xlane.xlu0 %292
        %v295 = vperm.slane %v285, 0
        %v297 = vmul.f32 %v283, %v295
        %v298 = vsel %vm290, %v297, 0.0
        %299 = vadd.xlane.f32.xlu0 %v298
        %v300 = vpop.xlane.xlu0 %299
        %v301 = vadd.f32 %v293, %v300
        %s302 = sld [smem:[#allocation2]]
        %v303 = vstv %s302
        %v304 = vadd.f32 %v301, %v303
        %v305 = vxor.u32 %v304, 2147483648
        %v306 = vmul.f32 %v305, 1.442695
        %v307 = vpow.pop %v306
        %v308 = vadd.f32 %v307, 1.0
        %v309 = vrcp.pop %v308
        %v310 = vmul.f32 %v308, %v309
        %v311 = vsub.f32 1.0, %v310
        %v312 = vmul.f32 %v309, %v311
        %v313 = vadd.f32 %v309, %v312
        %vm314 = vweird.f32 %v308
        %vm315 = vweird.f32 %v309
        %vm316 = vmor %vm314, %vm315
        %v317 = vsel %vm316, %v309, %v313
        %v318 = vand.u32 2147483647, %v308
        %vm319 = vcmp.eq.f32.partialorder %v318, 8.507059e+37
        %v320 = vand.u32 %v308, 2147483648
        %v321 = vor.u32 1.1754944e-38, %v320
        %v322 = vsel %vm319, %v321, %v317
        %v323 = vmul.f32 1.0, %v322
        %v324 = vmul.f32 %v282, %v323
        %325 = vst.msk [vmem:[%s281] sm:$0xff] %vm290, %v324
        %v326 = vsub.f32 1.0, %v323
        %v327 = vmul.f32 %v283, %v326
        %329 = vrot.lane.b32.xlu0 %v327, 32
        %v330 = vpop.permute.xlu0 %329
        %vm332 = vcmask 523520
        %333 = vst.msk [vmem:[%s281] sm:$0xff] %vm332, %v330
        %s334 = sand.u32 %s149, 1
        %s335 = scalar_lea.sflag [#allocation5], %s334
        %s336 = sand.u32 %s149, 1
        %s337 = smul.addr %s336, 8
        %s338 = scalar_lea.vmem [#allocation8], %s337
        // Predicated region
        $region49: #{tpu_custom_call.1} parent=39 // pred_check
          %p339 = pneg %p159
        $region50: #{tpu_custom_call.1} parent=39 // pred_check_branch
          %341 = sbr.rel (%p339) target = $region52
        $region51: #{tpu_custom_call.1} parent=39 // pred_region
          %343 = vsyncadd %s335, 0
          %s344 = smul.addr %s26, 8
          %s345 = scalar_lea.hbm %s5, %s344
          %s347 = sshll.u32 %s338, 4
          %s348 = int_to_ptr.vmem [resolvable:$true] %s347
          %s349 = sshll.u32 %s345, 4
          %s350 = int_to_ptr.hbm [resolvable:$true] %s349
          %352 = dma.vmem_to_hbm [thread:$0]  %s348, 128, %s350, %s335
        $region52: #{tpu_custom_call.1} parent=39 // pred_fallthru
          _
      $region40: #{tpu_custom_call.1} parent=5 // pred_fallthru
        _
      %p353 = scmp.le.s32.totalorder 2, %s21
      // Predicated region
      $region53: #{tpu_custom_call.1} parent=5 // pred_check
        %p354 = pneg %p353
      $region54: #{tpu_custom_call.1} parent=5 // pred_check_branch
        %356 = sbr.rel (%p354) target = $region56
      $region55: #{tpu_custom_call.1} parent=5 // pred_region
        %s357 = ssub.s32 %s21, 2
        // Predicated region
        $region57: #{tpu_custom_call.1} parent=55 // pred_check
          %p358 = pneg %p165
        $region58: #{tpu_custom_call.1} parent=55 // pred_check_branch
          %360 = sbr.rel (%p358) target = $region60
        $region59: #{tpu_custom_call.1} parent=55 // pred_region
          %s361 = sand.u32 %s150, 1
          %s362 = scalar_lea.sflag [#allocation5], %s361
          %s363 = sand.u32 %s150, 1
          %s364 = smul.addr %s363, 8
          %s365 = scalar_lea.vmem [#allocation8], %s364
          %367 = dma.done %s362, 128
        $region60: #{tpu_custom_call.1} parent=55 // pred_fallthru
          _
      $region56: #{tpu_custom_call.1} parent=5 // pred_fallthru
        _
    $region6: #{tpu_custom_call.1} parent=1 // loop_footer
      %s25 = sadd.s32 1, %s21
    $region7: #{tpu_custom_call.1} parent=1 // loop_footer_branch
      %20 = sbr.rel target = $region3
    $region8: #{tpu_custom_call.1} parent=1 // loop_exit
      _
    %368 = vsyncpa [#allocation4], 1
    %s369 = scalar_lea.sflag [#allocation4], 1
    %370 = vsyncpa %s369, 1
    %371 = vsyncpa [#allocation7], 1
    %s372 = scalar_lea.sflag [#allocation7], 1
    %373 = vsyncpa %s372, 1
    %374 = vsyncpa [#allocation5], 1
    %s375 = scalar_lea.sflag [#allocation5], 1
    %376 = vsyncpa %s375, 1

</llo_original>
